<compile_context>
chip_gen: v6e
topology: v6e:2x2x1
jax: 0.10.0
libtpu: 0.0.40
codegen_flags: <defaults>
</compile_context>

<pallas_src>
import functools

import jax
import jax.numpy as jnp
from jax.experimental import pallas as pl
from jax.experimental.pallas import tpu as pltpu


def _round_up(a, b):
    return (a + b - 1) // b * b


# ----------------------------- Pallas kernel ------------------------------ #
def _nconv_kernel(a_ref, x_ref, o_ref):
    """One M-tile of out_t = A^T @ X_t.

    a_ref : (W, V)   A transposed (resident across the grid)
    x_ref : (V, TM)  lane-dense slab of the flattened input
    o_ref : (W, TM)  lane-dense output slab
    """
    o_ref[...] = jnp.dot(
        a_ref[...], x_ref[...], preferred_element_type=jnp.float32
    ).astype(o_ref.dtype)


# ------------------------------- Wrapper ----------------------------------- #
def nconv_pallas(x, A, *, tm_max=2048, vmem_budget_bytes=12 * 1024 * 1024):
    """x: (N, C, V, L), A: (V, W) -> (N, C, W, L)  (== einsum 'ncvl,vw->ncwl')."""
    N, C, V, L = x.shape
    Va, W = A.shape
    assert Va == V, "A's first dim must match the node axis of x"

    M = N * C * L
    itemsize = jnp.dtype(x.dtype).itemsize
    Vp = _round_up(V, 8)   # sublane padding the (V, TM) tile will occupy
    Wp = _round_up(W, 8)   # sublane padding the (W, TM) tile will occupy

    # Largest lane tile whose double-buffered x/out slabs fit the VMEM budget
    # (2x for Pallas' input+output double buffering), multiple of 128 lanes.
    bytes_per_lane = 2 * (Vp + Wp) * itemsize
    tm_cap = max(128, (vmem_budget_bytes // bytes_per_lane) // 128 * 128)
    Mp128 = _round_up(M, 128)
    TM = max(128, min(tm_max, Mp128, tm_cap))
    Mp = _round_up(M, TM)                 # pad so the grid divides exactly
    grid_m = Mp // TM

    # --- glue: one transpose pass in ---------------------------------------
    # (N, C, V, L) -> (V, N, C, L) -> (V, M) [free reshape] -> lane pad to Mp.
    x_vm = jnp.transpose(x, (2, 0, 1, 3)).reshape(V, M)
    if Mp != M:
        x_vm = jnp.pad(x_vm, ((0, 0), (0, Mp - M)))
    a_t = A.T                              # (W, V), tiny, resident in VMEM

    cost = pl.CostEstimate(
        flops=2 * M * V * W,
        transcendentals=0,
        bytes_accessed=(V * Mp + W * Mp + V * W) * itemsize,
    )

    out_wm = pl.pallas_call(
        _nconv_kernel,
        out_shape=jax.ShapeDtypeStruct((W, Mp), x.dtype),
        grid_spec=pltpu.PrefetchScalarGridSpec(
            num_scalar_prefetch=0,
            grid=(grid_m,),
            in_specs=[
                pl.BlockSpec((W, V), lambda i: (0, 0)),    # A^T, grid-invariant
                pl.BlockSpec((V, TM), lambda i: (0, i)),   # x slab
            ],
            out_specs=pl.BlockSpec((W, TM), lambda i: (0, i)),
        ),
        compiler_params=pltpu.CompilerParams(
            dimension_semantics=("parallel",),
        ),
        cost_estimate=cost,
    )(a_t, x_vm)

    # --- glue: one transpose pass out ---------------------------------------
    # (W, Mp) -> drop lane padding -> (W, N, C, L) [free reshape] -> (N, C, W, L)
    out_wm = out_wm[:, :M]
    return jnp.transpose(out_wm.reshape(W, N, C, L), (1, 2, 0, 3))


# ------------------------- Pure-JAX reference ------------------------------ #
def nconv_reference(x, A):
    return jnp.einsum('ncvl,vw->ncwl', x, A)


# --------------------------------- Demo ------------------------------------ #
if __name__ == "__main__":
    # Small, shape-consistent config: x (batch, channels, nodes, seq), A (nodes, nodes).
    N, C, V, L = 2, 4, 16, 16
    W = 16

    key = jax.random.PRNGKey(0)
    k_x, k_a = jax.random.split(key, 2)
    x = jax.random.normal(k_x, (N, C, V, L), jnp.float32)
    A = jax.random.normal(k_a, (V, W), jnp.float32)

    run = jax.jit(functools.partial(nconv_pallas))
    out = jax.block_until_ready(run(x, A))

    ref = nconv_reference(x, A)
    assert out.shape == (N, C, W, L), out.shape
    assert jnp.allclose(out, ref, atol=1e-4, rtol=1e-4), "mismatch vs reference"

    print("KERNEL_OK")
</pallas_src>

<mosaic_0001>
module attributes {stable_mosaic.version = 11 : i64} {
  func.func @_nconv_kernel(%arg0: i32, %arg1: memref<16x16xf32, #tpu.memory_space<vmem>>, %arg2: memref<16x128xf32, #tpu.memory_space<vmem>>, %arg3: memref<16x128xf32, #tpu.memory_space<vmem>>) attributes {dimension_semantics = [#tpu.dimension_semantics<parallel>], iteration_bounds = array<i64: 1>, scalar_prefetch = 0 : i64, scratch_operands = 0 : i64, tpu.core_type = #tpu.core_type<tc>, window_params = [{pipeline_mode = #tpu.pipeline_mode<synchronous>, transform_indices = @transform_0, window_bounds = array<i64: 16, 16>}, {transform_indices = @transform_1, window_bounds = array<i64: 16, 128>}, {transform_indices = @transform_2, window_bounds = array<i64: 16, 128>}]} {
    %c0 = arith.constant 0 : index
    %c0_0 = arith.constant 0 : index
    %0 = vector.load %arg1[%c0, %c0_0] : memref<16x16xf32, #tpu.memory_space<vmem>>, vector<16x16xf32>
    %c0_1 = arith.constant 0 : index
    %c0_2 = arith.constant 0 : index
    %1 = vector.load %arg2[%c0_1, %c0_2] : memref<16x128xf32, #tpu.memory_space<vmem>>, vector<16x128xf32>
    %cst = arith.constant dense<0.000000e+00> : vector<16x128xf32>
    %2 = tpu.matmul %0, %1, %cst {dimension_numbers = #tpu.dot_dimension_numbers<[1], [0], [0], [1], [0, 0, 1, 1], [], []>} : vector<16x16xf32>, vector<16x128xf32>, vector<16x128xf32> -> vector<16x128xf32>
    %c0_3 = arith.constant 0 : index
    %c0_4 = arith.constant 0 : index
    %3 = vector.load %arg3[%c0_3, %c0_4] : memref<16x128xf32, #tpu.memory_space<vmem>>, vector<16x128xf32>
    tpu.vector_store %arg3[%c0_3, %c0_4], %2 {strides = array<i32>} : memref<16x128xf32, #tpu.memory_space<vmem>>, vector<16x128xf32>,
    return
  }
  func.func @transform_0(%arg0: i32) -> (i32, i32) {
    %c0_i32 = arith.constant 0 : i32
    %c0_i32_0 = arith.constant 0 : i32
    %c0_i32_1 = arith.constant 0 : i32
    return %c0_i32, %c0_i32_0 : i32, i32
  }
  func.func @transform_1(%arg0: i32) -> (i32, i32) {
    %c0_i32 = arith.constant 0 : i32
    %c0_i32_0 = arith.constant 0 : i32
    return %c0_i32, %arg0 : i32, i32
  }
  func.func @transform_2(%arg0: i32) -> (i32, i32) {
    %c0_i32 = arith.constant 0 : i32
    %c0_i32_0 = arith.constant 0 : i32
    return %c0_i32, %arg0 : i32, i32
  }
}

</mosaic_0001>

<llo_original>
// kernel: nconv_pallas.1
$region0: #{nconv_pallas.1}
  #allocation0 [shape = 'u32[]', space=smem, size = 0x4, offset = 0x4, fixed_abs, tag = 'smem constant byte address 0x4 - core index']
  #allocation1 [shape = 'u32[144,128]{1,0:T(1,128)}', space=vmem, size = 0x12000, scoped, tag = 'internal scratch']
  %s0 = inlined_call_operand.vmem [shape: f32[16,16], index: 0, kind: input, shape index: {}]
  %s1 = inlined_call_operand.vmem [shape: f32[16,128], index: 1, kind: input, shape index: {}]
  %s2 = inlined_call_operand.vmem [shape: f32[16,128], index: 2, kind: output, shape index: {}]
  %s3 = sld [smem:[#allocation0]]
  $region18: #{nconv_pallas.1} parent=0
    _
  %s5 = ssub.s32 1, %s3
  %s6 = scalar_select 0, %s5, %s3
  // Predicated region
  $region2: #{nconv_pallas.1} parent=0 // pred_check
    _
  $region3: #{nconv_pallas.1} parent=0 // pred_check_branch
    %8 = sbr.rel (0) target = $region5
  $region4: #{nconv_pallas.1} parent=0 // pred_region
    _
  $region5: #{nconv_pallas.1} parent=0 // pred_fallthru
    _
  // Predicated region
  $region6: #{nconv_pallas.1} parent=0 // pred_check
    _
  $region7: #{nconv_pallas.1} parent=0 // pred_check_branch
    %10 = sbr.rel (0) target = $region9
  $region8: #{nconv_pallas.1} parent=0 // pred_region
    _
  $region9: #{nconv_pallas.1} parent=0 // pred_fallthru
    _
  %v11 = vld [vmem:[%s0] sm:$0xff]
  %v12 = vld [vmem:[%s0 + $0x8] sm:$0xff]
  %v13 = vld [vmem:[%s1] sm:$0xff]
  %v14 = vld [vmem:[%s1 + $0x8] sm:$0xff]
  %vm15 = vcmask 130048
  %v17 = vsel %vm15, %v11, 0
  %v20 = vsel %vm15, %v12, 0
  %22 = vmatprep.subr.mxu0 0.0
  %23 = vmatpush1.msra.mxu0 0.0
  %24 = vmatprep.subr.mxu0 0.0
  %25 = vmatpush1.msra.mxu0 0.0
  %26 = vmatprep.subr.mxu0 0.0
  %27 = vmatpush1.msra.mxu0 0.0
  %28 = vmatprep.subr.mxu0 0.0
  %29 = vmatpush1.msra.mxu0 0.0
  %30 = vmatprep.subr.mxu0 0.0
  %31 = vmatpush1.msra.mxu0 0.0
  %32 = vmatprep.subr.mxu0 0.0
  %33 = vmatpush1.msra.mxu0 0.0
  %34 = vmatprep.subr.mxu0 0.0
  %35 = vmatpush1.msra.mxu0 0.0
  %36 = vmatprep.subr.mxu0 0.0
  %37 = vmatpush1.msra.mxu0 0.0
  %38 = vmatprep.subr.mxu0 0.0
  %39 = vmatpush1.msra.mxu0 0.0
  %40 = vmatprep.subr.mxu0 0.0
  %41 = vmatpush1.msra.mxu0 0.0
  %42 = vmatprep.subr.mxu0 0.0
  %43 = vmatpush1.msra.mxu0 0.0
  %44 = vmatprep.subr.mxu0 0.0
  %45 = vmatpush1.msra.mxu0 0.0
  %46 = vmatprep.subr.mxu0 0.0
  %47 = vmatpush1.msra.mxu0 0.0
  %48 = vmatprep.subr.mxu0 0.0
  %49 = vmatpush1.msra.mxu0 0.0
  %50 = vmatprep.subr.mxu0 0.0
  %51 = vmatpush1.msra.mxu0 %v14
  %52 = vmatprep.subr.mxu0 0.0
  %53 = vmatpush1.msra.mxu0 %v13
  %54 = vmatprep.subr.mxu0 0.0
  %55 = vmatpush2.msra.mxu0 0.0
  %56 = vmatprep.subr.mxu0 0.0
  %57 = vmatpush2.msra.mxu0 0.0
  %58 = vmatprep.subr.mxu0 0.0
  %59 = vmatpush2.msra.mxu0 0.0
  %60 = vmatprep.subr.mxu0 0.0
  %61 = vmatpush2.msra.mxu0 0.0
  %62 = vmatprep.subr.mxu0 0.0
  %63 = vmatpush2.msra.mxu0 0.0
  %64 = vmatprep.subr.mxu0 0.0
  %65 = vmatpush2.msra.mxu0 0.0
  %66 = vmatprep.subr.mxu0 0.0
  %67 = vmatpush2.msra.mxu0 0.0
  %68 = vmatprep.subr.mxu0 0.0
  %69 = vmatpush2.msra.mxu0 0.0
  %70 = vmatprep.subr.mxu0 0.0
  %71 = vmatpush2.msra.mxu0 0.0
  %72 = vmatprep.subr.mxu0 0.0
  %73 = vmatpush2.msra.mxu0 0.0
  %74 = vmatprep.subr.mxu0 0.0
  %75 = vmatpush2.msra.mxu0 0.0
  %76 = vmatprep.subr.mxu0 0.0
  %77 = vmatpush2.msra.mxu0 0.0
  %78 = vmatprep.subr.mxu0 0.0
  %79 = vmatpush2.msra.mxu0 0.0
  %80 = vmatprep.subr.mxu0 0.0
  %81 = vmatpush2.msra.mxu0 0.0
  %82 = vmatprep.subr.mxu0 0.0
  %83 = vmatpush2.msra.mxu0 0.0
  %84 = vmatprep.subr.mxu0 0.0
  %85 = vmatpush2.msra.mxu0 0.0
  %86 = vmatprep.mubr.f32.mxu0 0.0
  %87 = vmatmul.mubr.f32.gmra.mxu0 %v17
  %v88 = vpop.f32.mrf.mxu0
  %v89 = vadd.f32 0.0, %v88
  %v90 = vpop.f32.mrf.mxu0
  %91 = vmatprep.mubr.f32.mxu0 0.0
  %92 = vmatmul.mubr.f32.gmra.mxu0 %v20
  %v93 = vpop.f32.mrf.mxu0
  %v94 = vadd.f32 0.0, %v93
  %v95 = vpop.f32.mrf.mxu0
  %96 = vdwg.mxu0
  %97 = vst [vmem:[%s2] sm:$0xff] %v89
  %98 = vst [vmem:[%s2 + $0x8] sm:$0xff] %v94
  // Predicated region
  $region10: #{nconv_pallas.1} parent=0 // pred_check
    _
  $region11: #{nconv_pallas.1} parent=0 // pred_check_branch
    %100 = sbr.rel (0) target = $region13
  $region12: #{nconv_pallas.1} parent=0 // pred_region
    _
  $region13: #{nconv_pallas.1} parent=0 // pred_fallthru
    _
  // Predicated region
  $region14: #{nconv_pallas.1} parent=0 // pred_check
    _
  $region15: #{nconv_pallas.1} parent=0 // pred_check_branch
    %102 = sbr.rel (0) target = $region17
  $region16: #{nconv_pallas.1} parent=0 // pred_region
    _
  $region17: #{nconv_pallas.1} parent=0 // pred_fallthru
    _

</llo_original>
